<compile_context>
chip_gen: v5e
topology: v5e:2x2
jax: 0.10.0
libtpu: 0.0.40
codegen_flags: <defaults>
</compile_context>

<pallas_src>
import math
import functools

import jax
import jax.numpy as jnp
from jax.experimental import pallas as pl
from jax.experimental.pallas import tpu as pltpu

LATENT_DIM = 32            # cfg.latent_dim
NUM_STEPS = 16             # cfg.diffusion.timesteps
TIME_EMB_DIM = 128
DROPOUT_P = 0.1
LN_EPS = 1e-5
DEFAULT_MAX_TILE_B = 1024


# ----------------------------------------------------------------------------
# Kernel
# ----------------------------------------------------------------------------
def _flow_kernel(*refs, training: bool):
    if training:
        (xin_ref, drop_ref, w_in_ref, ln_g_ref, ln_b_ref,
         w2_ref, b2_ref, w3_ref, b3_ref, pred_ref) = refs
    else:
        (xin_ref, w_in_ref, ln_g_ref, ln_b_ref,
         w2_ref, b2_ref, w3_ref, b3_ref, pred_ref) = refs
        drop_ref = None

    # Fused first denoising layer.  xin = [z_t | cond | onehot(t) | 0] (bf16).
    # W_in rows = [dn_w1h ; cp_w@dn_w1h ; timestep_table ; 0], with the
    # condition-proj bias, dn_b1, the full time-embed MLP output and the
    # t_norm*dn_w1t column already folded into the table rows.
    h1 = jnp.dot(xin_ref[...], w_in_ref[...],
                 preferred_element_type=jnp.float32)            # (T, H) f32
    h1 = h1 * jax.nn.sigmoid(h1)                                # SiLU

    # LayerNorm(H) in f32
    mu = jnp.mean(h1, axis=-1, keepdims=True)
    ctr = h1 - mu
    var = jnp.mean(ctr * ctr, axis=-1, keepdims=True)
    h1 = ctr * jax.lax.rsqrt(var + LN_EPS)
    h1 = h1 * ln_g_ref[...] + ln_b_ref[...]

    # Linear(H, H) -> SiLU -> Dropout
    h2 = jnp.dot(h1.astype(jnp.bfloat16), w2_ref[...],
                 preferred_element_type=jnp.float32) + b2_ref[...]
    h2 = h2 * jax.nn.sigmoid(h2)
    if training:
        # 0/1 keep mask; 1/(1-p) is pre-folded into w3 in the wrapper.
        h2 = h2 * drop_ref[...].astype(jnp.float32)

    # Linear(H, D)
    pred = jnp.dot(h2.astype(jnp.bfloat16), w3_ref[...],
                   preferred_element_type=jnp.float32) + b3_ref[...]
    pred_ref[...] = pred.astype(pred_ref.dtype)


# ----------------------------------------------------------------------------
# Wrapper
# ----------------------------------------------------------------------------
def _round_up(x, m):
    return (x + m - 1) // m * m


def _timestep_table(params, num_steps):
    """(num_steps, H) table: first-layer contribution of timestep k =
    time_embed(sin_emb(k)) @ dn_w1h + (k/S) * dn_w1t + dn_b1 + cp_b @ dn_w1h."""
    half = TIME_EMB_DIM // 2
    ks = jnp.arange(half, dtype=jnp.float32)
    freqs = jnp.exp(ks * (-math.log(10000.0) / (half - 1)))
    t_steps = jnp.arange(num_steps, dtype=jnp.float32)[:, None]       # (S, 1)
    ang = t_steps * freqs[None, :]
    sin_emb = jnp.concatenate([jnp.sin(ang), jnp.cos(ang)], axis=1)   # (S, 128)
    h = sin_emb @ params["te_w1"] + params["te_b1"]
    h = h * jax.nn.sigmoid(h)
    t_emb = h @ params["te_w2"] + params["te_b2"]                     # (S, D)
    t_norm = t_steps / float(num_steps)
    return (t_emb @ params["dn_w1h"] + t_norm * params["dn_w1t"]
            + params["dn_b1"] + params["cp_b"] @ params["dn_w1h"])    # (S, H)


def flow_matcher_apply(params, z0, condition, t, noise, *, dropout_mask=None,
                       num_steps=NUM_STEPS, max_tile_b=DEFAULT_MAX_TILE_B):
    """Core pallas_call wrapper; randomness (t, noise, dropout mask) passed in.
    training mode <=> dropout_mask is not None."""
    B, D = z0.shape
    H = params["dn_w2"].shape[0]                    # 4*D
    training = dropout_mask is not None

    # ---- batch tiling (pad B up to a whole number of tiles) -----------------
    desired = min(max_tile_b, _round_up(B, 8))
    if B >= 16:                                     # >=2 tiles -> v7x megacore
        desired = min(desired, _round_up(-(-B // 2), 8))
    tile_b = max(8, (desired // 8) * 8)
    num_tiles = -(-B // tile_b)
    b_pad = num_tiles * tile_b

    # ---- wrapper-side weight fusion (done once, fused by XLA) ---------------
    table = _timestep_table(params, num_steps)                        # (S, H)
    raw_w = 2 * D + num_steps
    pack_w = max(128, _round_up(raw_w, 128))
    w_in = jnp.concatenate(
        [params["dn_w1h"],                           # z_t rows      (D,  H)
         params["cp_w"] @ params["dn_w1h"],          # cond rows     (D,  H)
         table,                                      # one-hot rows  (S,  H)
         jnp.zeros((pack_w - raw_w, H), jnp.float32)],
        axis=0).astype(jnp.bfloat16)                                  # (128, H)
    w2 = params["dn_w2"].astype(jnp.bfloat16)
    w3 = params["dn_w3"]
    if training:
        w3 = w3 * (1.0 / (1.0 - DROPOUT_P))          # fold dropout scale
    w3 = w3.astype(jnp.bfloat16)

    # ---- lane-dense packed per-row input  [z_t | cond | onehot(t) | 0] ------
    t_f = t.astype(jnp.float32).reshape(B, 1)
    t_norm = t_f / float(num_steps)
    z_t = (1.0 - t_norm) * z0 + t_norm * noise
    onehot = jax.nn.one_hot(t, num_steps, dtype=jnp.float32)
    xin = jnp.concatenate(
        [z_t, condition, onehot, jnp.zeros((B, pack_w - raw_w), jnp.float32)],
        axis=1)
    xin = jnp.pad(xin, ((0, b_pad - B), (0, 0))).astype(jnp.bfloat16)

    def data_spec(cols):
        return pl.BlockSpec((tile_b, cols), lambda i: (i, 0))

    def const_spec(shape):
        return pl.BlockSpec(shape, lambda i: (0,) * len(shape))

    consts = (w_in, params["ln_g"], params["ln_b"], w2, params["dn_b2"],
              w3, params["dn_b3"])
    if training:
        mask = jnp.pad(dropout_mask.astype(jnp.bfloat16),
                       ((0, b_pad - B), (0, 0)), constant_values=1.0)
        inputs = (xin, mask) + consts
        in_specs = ([data_spec(pack_w), data_spec(H)]
                    + [const_spec(a.shape) for a in consts])
    else:
        inputs = (xin,) + consts
        in_specs = [data_spec(pack_w)] + [const_spec(a.shape) for a in consts]

    flops = int(2 * b_pad * (pack_w * H + H * H + H * D))
    transcendentals = int(b_pad * (2 * H + 1))
    bytes_accessed = int(sum(int(a.size) * a.dtype.itemsize for a in inputs)
                         + b_pad * D * 4)

    kernel = functools.partial(_flow_kernel, training=training)

    pred = pl.pallas_call(
        kernel,
        grid_spec=pltpu.PrefetchScalarGridSpec(
            num_scalar_prefetch=0,
            grid=(num_tiles,),
            in_specs=in_specs,
            out_specs=data_spec(D),
        ),
        out_shape=jax.ShapeDtypeStruct((b_pad, D), jnp.float32),
        compiler_params=pltpu.CompilerParams(
            dimension_semantics=("parallel",),
            vmem_limit_bytes=32 * 1024 * 1024),
        cost_estimate=pl.CostEstimate(flops=flops,
                                      transcendentals=transcendentals,
                                      bytes_accessed=bytes_accessed),
    )(*inputs)

    pred = pred[:B]
    target = noise - z0                              # elementwise, fused by XLA
    loss = jnp.mean((pred - target) ** 2)
    return pred, loss, target


def flow_matcher_forward(params, z0, condition, key, *,
                         num_steps=NUM_STEPS, max_tile_b=DEFAULT_MAX_TILE_B):
    """Reproduces FlowMatcher.forward (training mode); randomness from `key`."""
    B, D = z0.shape
    H = 4 * D
    k_t, k_noise, k_drop = jax.random.split(key, 3)
    t = jax.random.randint(k_t, (B,), 0, num_steps)
    noise = jax.random.normal(k_noise, z0.shape, dtype=jnp.float32)
    keep = jax.random.bernoulli(k_drop, 1.0 - DROPOUT_P, (B, H)).astype(jnp.float32)
    return flow_matcher_apply(params, z0, condition, t, noise,
                              dropout_mask=keep, num_steps=num_steps,
                              max_tile_b=max_tile_b)


# ----------------------------------------------------------------------------
# Pure-JAX reference (torch module semantics, eval mode) & param init
# ----------------------------------------------------------------------------
def flow_matcher_reference(params, z0, condition, t, noise, num_steps):
    t_f = t.astype(jnp.float32).reshape(-1, 1)
    t_norm = t_f / num_steps
    z_t = (1.0 - t_norm) * z0 + t_norm * noise
    half = TIME_EMB_DIM // 2
    ks = jnp.arange(half, dtype=jnp.float32)
    freqs = jnp.exp(ks * (-math.log(10000.0) / (half - 1)))
    ang = t_f * freqs[None, :]
    t_sin = jnp.concatenate([jnp.sin(ang), jnp.cos(ang)], axis=1)
    h = t_sin @ params["te_w1"] + params["te_b1"]
    h = h * jax.nn.sigmoid(h)
    t_emb = h @ params["te_w2"] + params["te_b2"]
    cond_proj = condition @ params["cp_w"] + params["cp_b"]
    x = z_t + cond_proj + t_emb
    net_in = jnp.concatenate([x, t_norm], axis=1)
    dn_w1 = jnp.concatenate([params["dn_w1h"], params["dn_w1t"]], axis=0)
    h1 = net_in @ dn_w1 + params["dn_b1"]
    h1 = h1 * jax.nn.sigmoid(h1)
    mu = h1.mean(-1, keepdims=True)
    var = ((h1 - mu) ** 2).mean(-1, keepdims=True)
    h1 = (h1 - mu) / jnp.sqrt(var + LN_EPS)
    h1 = h1 * params["ln_g"] + params["ln_b"]
    h2 = h1 @ params["dn_w2"] + params["dn_b2"]
    h2 = h2 * jax.nn.sigmoid(h2)
    pred = h2 @ params["dn_w3"] + params["dn_b3"]
    target = noise - z0
    loss = jnp.mean((pred - target) ** 2)
    return pred, loss, target


def init_params(key, latent_dim=LATENT_DIM):
    """Deterministic synthetic parameter init (shapes match the nn.Module)."""
    D, H = latent_dim, 4 * latent_dim
    keys = jax.random.split(key, 8)

    def w(k, shape, fan_in):
        return (jax.random.normal(k, shape, dtype=jnp.float32)
                / jnp.sqrt(jnp.float32(fan_in)))

    dn_w1_full = w(keys[0], (D + 1, H), D + 1)     # Linear(D+1, 4D), split rows
    return {
        "te_w1": w(keys[1], (TIME_EMB_DIM, 256), TIME_EMB_DIM),
        "te_b1": jnp.zeros((1, 256), jnp.float32),
        "te_w2": w(keys[2], (256, D), 256),
        "te_b2": jnp.zeros((1, D), jnp.float32),
        "cp_w": w(keys[3], (D, D), D),
        "cp_b": jnp.zeros((1, D), jnp.float32),
        "dn_w1h": dn_w1_full[:D, :],
        "dn_w1t": dn_w1_full[D:, :],               # (1, 4D)
        "dn_b1": jnp.zeros((1, H), jnp.float32),
        "ln_g": jnp.ones((1, H), jnp.float32),
        "ln_b": jnp.zeros((1, H), jnp.float32),
        "dn_w2": w(keys[4], (H, H), H),
        "dn_b2": jnp.zeros((1, H), jnp.float32),
        "dn_w3": w(keys[5], (H, D), H),
        "dn_b3": jnp.zeros((1, D), jnp.float32),
    }


if __name__ == "__main__":
    key = jax.random.PRNGKey(0)
    k_param, k_z0, k_cond, k_t, k_noise, k_fwd = jax.random.split(key, 6)

    B, D = 64, LATENT_DIM
    params = init_params(k_param, D)
    z0 = jax.random.normal(k_z0, (B, D), dtype=jnp.float32)
    condition = jax.random.normal(k_cond, (B, D), dtype=jnp.float32)

    # ---- eval-mode correctness vs. f32 reference; small tile -> grid (4,) ---
    t_chk = jax.random.randint(k_t, (B,), 0, NUM_STEPS)
    noise_chk = jax.random.normal(k_noise, (B, D), dtype=jnp.float32)
    pred_k, loss_k, target_k = flow_matcher_apply(
        params, z0, condition, t_chk, noise_chk, max_tile_b=16)
    pred_r, loss_r, target_r = flow_matcher_reference(
        params, z0, condition, t_chk, noise_chk, NUM_STEPS)
    jax.block_until_ready((pred_k, loss_k, target_k))
    # bf16 matmul operands -> loose tolerance vs. the f32 reference
    assert bool(jnp.allclose(pred_k, pred_r, atol=1e-1, rtol=1e-1))
    assert bool(jnp.allclose(loss_k, loss_r, atol=1e-1, rtol=1e-1))
    assert bool(jnp.allclose(target_k, target_r))

    # ---- training-mode forward (wrapper-side dropout mask, default tiles) ---
    pred, loss, target = flow_matcher_forward(params, z0, condition, k_fwd)
    jax.block_until_ready((pred, loss, target))
    assert pred.shape == (B, D) and target.shape == (B, D) and loss.shape == ()
    assert bool(jnp.isfinite(loss)) and bool(jnp.all(jnp.isfinite(pred)))
    print("KERNEL_OK")
</pallas_src>

<mosaic_0001>
module attributes {stable_mosaic.version = 11 : i64} {
  func.func @_flow_kernel(%arg0: i32, %arg1: memref<16x128xbf16, #tpu.memory_space<vmem>>, %arg2: memref<128x128xbf16, #tpu.memory_space<vmem>>, %arg3: memref<1x128xf32, #tpu.memory_space<vmem>>, %arg4: memref<1x128xf32, #tpu.memory_space<vmem>>, %arg5: memref<128x128xbf16, #tpu.memory_space<vmem>>, %arg6: memref<1x128xf32, #tpu.memory_space<vmem>>, %arg7: memref<128x32xbf16, #tpu.memory_space<vmem>>, %arg8: memref<1x32xf32, #tpu.memory_space<vmem>>, %arg9: memref<16x32xf32, #tpu.memory_space<vmem>>) attributes {dimension_semantics = [#tpu.dimension_semantics<parallel>], iteration_bounds = array<i64: 4>, scalar_prefetch = 0 : i64, scratch_operands = 0 : i64, tpu.core_type = #tpu.core_type<tc>, window_params = [{transform_indices = @transform_0, window_bounds = array<i64: 16, 128>}, {pipeline_mode = #tpu.pipeline_mode<synchronous>, transform_indices = @transform_1, window_bounds = array<i64: 128, 128>}, {pipeline_mode = #tpu.pipeline_mode<synchronous>, transform_indices = @transform_2, window_bounds = array<i64: 1, 128>}, {pipeline_mode = #tpu.pipeline_mode<synchronous>, transform_indices = @transform_3, window_bounds = array<i64: 1, 128>}, {pipeline_mode = #tpu.pipeline_mode<synchronous>, transform_indices = @transform_4, window_bounds = array<i64: 128, 128>}, {pipeline_mode = #tpu.pipeline_mode<synchronous>, transform_indices = @transform_5, window_bounds = array<i64: 1, 128>}, {pipeline_mode = #tpu.pipeline_mode<synchronous>, transform_indices = @transform_6, window_bounds = array<i64: 128, 32>}, {pipeline_mode = #tpu.pipeline_mode<synchronous>, transform_indices = @transform_7, window_bounds = array<i64: 1, 32>}, {transform_indices = @transform_8, window_bounds = array<i64: 16, 32>}]} {
    %c0 = arith.constant 0 : index
    %c0_0 = arith.constant 0 : index
    %0 = vector.load %arg1[%c0, %c0_0] : memref<16x128xbf16, #tpu.memory_space<vmem>>, vector<16x128xbf16>
    %c0_1 = arith.constant 0 : index
    %c0_2 = arith.constant 0 : index
    %1 = vector.load %arg2[%c0_1, %c0_2] : memref<128x128xbf16, #tpu.memory_space<vmem>>, vector<128x128xbf16>
    %cst = arith.constant dense<0.000000e+00> : vector<16x128xf32>
    %2 = tpu.matmul %0, %1, %cst {dimension_numbers = #tpu.dot_dimension_numbers<[1], [0], [0], [1], [0, 0, 1, 1], [], []>} : vector<16x128xbf16>, vector<128x128xbf16>, vector<16x128xf32> -> vector<16x128xf32>
    %3 = arith.negf %2 : vector<16x128xf32>
    %4 = math.exp %3 : vector<16x128xf32>
    %cst_3 = arith.constant 1.000000e+00 : f32
    %5 = vector.broadcast %cst_3 : f32 to vector<16x128xf32>
    %6 = arith.addf %5, %4 : vector<16x128xf32>
    %7 = arith.divf %5, %6 : vector<16x128xf32>
    %8 = arith.mulf %2, %7 : vector<16x128xf32>
    %cst_4 = arith.constant dense<0.000000e+00> : vector<16xf32>
    %9 = vector.multi_reduction <add>, %8, %cst_4 [1] : vector<16x128xf32> to vector<16xf32>
    %10 = vector.shape_cast %9 : vector<16xf32> to vector<16x1xf32>
    %cst_5 = arith.constant 1.280000e+02 : f32
    %11 = vector.broadcast %cst_5 : f32 to vector<16x1xf32>
    %12 = arith.divf %10, %11 : vector<16x1xf32>
    %13 = vector.broadcast %12 : vector<16x1xf32> to vector<16x128xf32>
    %14 = arith.subf %8, %13 : vector<16x128xf32>
    %15 = arith.mulf %14, %14 : vector<16x128xf32>
    %cst_6 = arith.constant dense<0.000000e+00> : vector<16xf32>
    %16 = vector.multi_reduction <add>, %15, %cst_6 [1] : vector<16x128xf32> to vector<16xf32>
    %17 = vector.shape_cast %16 : vector<16xf32> to vector<16x1xf32>
    %cst_7 = arith.constant 1.280000e+02 : f32
    %18 = vector.broadcast %cst_7 : f32 to vector<16x1xf32>
    %19 = arith.divf %17, %18 : vector<16x1xf32>
    %cst_8 = arith.constant 9.99999974E-6 : f32
    %20 = vector.broadcast %cst_8 : f32 to vector<16x1xf32>
    %21 = arith.addf %19, %20 : vector<16x1xf32>
    %22 = math.rsqrt %21 : vector<16x1xf32>
    %23 = vector.broadcast %22 : vector<16x1xf32> to vector<16x128xf32>
    %24 = arith.mulf %14, %23 : vector<16x128xf32>
    %c0_9 = arith.constant 0 : index
    %c0_10 = arith.constant 0 : index
    %25 = vector.load %arg3[%c0_9, %c0_10] : memref<1x128xf32, #tpu.memory_space<vmem>>, vector<1x128xf32>
    %26 = vector.broadcast %25 : vector<1x128xf32> to vector<16x128xf32>
    %27 = arith.mulf %24, %26 : vector<16x128xf32>
    %c0_11 = arith.constant 0 : index
    %c0_12 = arith.constant 0 : index
    %28 = vector.load %arg4[%c0_11, %c0_12] : memref<1x128xf32, #tpu.memory_space<vmem>>, vector<1x128xf32>
    %29 = vector.broadcast %28 : vector<1x128xf32> to vector<16x128xf32>
    %30 = arith.addf %27, %29 : vector<16x128xf32>
    %31 = arith.truncf %30 : vector<16x128xf32> to vector<16x128xbf16>
    %c0_13 = arith.constant 0 : index
    %c0_14 = arith.constant 0 : index
    %32 = vector.load %arg5[%c0_13, %c0_14] : memref<128x128xbf16, #tpu.memory_space<vmem>>, vector<128x128xbf16>
    %cst_15 = arith.constant dense<0.000000e+00> : vector<16x128xf32>
    %33 = tpu.matmul %31, %32, %cst_15 {dimension_numbers = #tpu.dot_dimension_numbers<[1], [0], [0], [1], [0, 0, 1, 1], [], []>} : vector<16x128xbf16>, vector<128x128xbf16>, vector<16x128xf32> -> vector<16x128xf32>
    %c0_16 = arith.constant 0 : index
    %c0_17 = arith.constant 0 : index
    %34 = vector.load %arg6[%c0_16, %c0_17] : memref<1x128xf32, #tpu.memory_space<vmem>>, vector<1x128xf32>
    %35 = vector.broadcast %34 : vector<1x128xf32> to vector<16x128xf32>
    %36 = arith.addf %33, %35 : vector<16x128xf32>
    %37 = arith.negf %36 : vector<16x128xf32>
    %38 = math.exp %37 : vector<16x128xf32>
    %cst_18 = arith.constant 1.000000e+00 : f32
    %39 = vector.broadcast %cst_18 : f32 to vector<16x128xf32>
    %40 = arith.addf %39, %38 : vector<16x128xf32>
    %41 = arith.divf %39, %40 : vector<16x128xf32>
    %42 = arith.mulf %36, %41 : vector<16x128xf32>
    %43 = arith.truncf %42 : vector<16x128xf32> to vector<16x128xbf16>
    %c0_19 = arith.constant 0 : index
    %c0_20 = arith.constant 0 : index
    %44 = vector.load %arg7[%c0_19, %c0_20] : memref<128x32xbf16, #tpu.memory_space<vmem>>, vector<128x32xbf16>
    %cst_21 = arith.constant dense<0.000000e+00> : vector<16x32xf32>
    %45 = tpu.matmul %43, %44, %cst_21 {dimension_numbers = #tpu.dot_dimension_numbers<[1], [0], [0], [1], [0, 0, 1, 1], [], []>} : vector<16x128xbf16>, vector<128x32xbf16>, vector<16x32xf32> -> vector<16x32xf32>
    %c0_22 = arith.constant 0 : index
    %c0_23 = arith.constant 0 : index
    %46 = vector.load %arg8[%c0_22, %c0_23] : memref<1x32xf32, #tpu.memory_space<vmem>>, vector<1x32xf32>
    %47 = vector.broadcast %46 : vector<1x32xf32> to vector<16x32xf32>
    %48 = arith.addf %45, %47 : vector<16x32xf32>
    %c0_24 = arith.constant 0 : index
    %c0_25 = arith.constant 0 : index
    %49 = vector.load %arg9[%c0_24, %c0_25] : memref<16x32xf32, #tpu.memory_space<vmem>>, vector<16x32xf32>
    tpu.vector_store %arg9[%c0_24, %c0_25], %48 {strides = array<i32>} : memref<16x32xf32, #tpu.memory_space<vmem>>, vector<16x32xf32>,
    return
  }
  func.func @transform_0(%arg0: i32) -> (i32, i32) {
    %c0_i32 = arith.constant 0 : i32
    %c0_i32_0 = arith.constant 0 : i32
    return %arg0, %c0_i32 : i32, i32
  }
  func.func @transform_1(%arg0: i32) -> (i32, i32) {
    %c0_i32 = arith.constant 0 : i32
    %c0_i32_0 = arith.constant 0 : i32
    %c0_i32_1 = arith.constant 0 : i32
    return %c0_i32, %c0_i32_0 : i32, i32
  }
  func.func @transform_2(%arg0: i32) -> (i32, i32) {
    %c0_i32 = arith.constant 0 : i32
    %c0_i32_0 = arith.constant 0 : i32
    %c0_i32_1 = arith.constant 0 : i32
    return %c0_i32, %c0_i32_0 : i32, i32
  }
  func.func @transform_3(%arg0: i32) -> (i32, i32) {
    %c0_i32 = arith.constant 0 : i32
    %c0_i32_0 = arith.constant 0 : i32
    %c0_i32_1 = arith.constant 0 : i32
    return %c0_i32, %c0_i32_0 : i32, i32
  }
  func.func @transform_4(%arg0: i32) -> (i32, i32) {
    %c0_i32 = arith.constant 0 : i32
    %c0_i32_0 = arith.constant 0 : i32
    %c0_i32_1 = arith.constant 0 : i32
    return %c0_i32, %c0_i32_0 : i32, i32
  }
  func.func @transform_5(%arg0: i32) -> (i32, i32) {
    %c0_i32 = arith.constant 0 : i32
    %c0_i32_0 = arith.constant 0 : i32
    %c0_i32_1 = arith.constant 0 : i32
    return %c0_i32, %c0_i32_0 : i32, i32
  }
  func.func @transform_6(%arg0: i32) -> (i32, i32) {
    %c0_i32 = arith.constant 0 : i32
    %c0_i32_0 = arith.constant 0 : i32
    %c0_i32_1 = arith.constant 0 : i32
    return %c0_i32, %c0_i32_0 : i32, i32
  }
  func.func @transform_7(%arg0: i32) -> (i32, i32) {
    %c0_i32 = arith.constant 0 : i32
    %c0_i32_0 = arith.constant 0 : i32
    %c0_i32_1 = arith.constant 0 : i32
    return %c0_i32, %c0_i32_0 : i32, i32
  }
  func.func @transform_8(%arg0: i32) -> (i32, i32) {
    %c0_i32 = arith.constant 0 : i32
    %c0_i32_0 = arith.constant 0 : i32
    return %arg0, %c0_i32 : i32, i32
  }
}

</mosaic_0001>

<llo_original>
// kernel: tpu_custom_call.1
$region0: #{tpu_custom_call.1}
  #allocation0 [shape = 'u32[]', space=smem, size = 0x4, offset = 0x4, fixed_abs, tag = 'smem constant byte address 0x4 - core index']
  #allocation1 [shape = 'u32[72,128]{1,0:T(1,128)}', space=vmem, size = 0x9000, scoped, tag = 'internal scratch']
  %s0 = inlined_call_operand.hbm [shape: bf16[64,128], index: 0, kind: input, shape index: {}]
  %s1 = inlined_call_operand.vmem [shape: bf16[128,128], index: 1, kind: input, shape index: {}]
  %s2 = inlined_call_operand.vmem [shape: f32[1,128], index: 2, kind: input, shape index: {}]
  %s3 = inlined_call_operand.vmem [shape: f32[1,128], index: 3, kind: input, shape index: {}]
  %s4 = inlined_call_operand.hbm [shape: bf16[128,128], index: 4, kind: input, shape index: {}]
  %s5 = inlined_call_operand.vmem [shape: f32[1,128], index: 5, kind: input, shape index: {}]
  %s6 = inlined_call_operand.vmem [shape: bf16[128,32], index: 6, kind: input, shape index: {}]
  %s7 = inlined_call_operand.vmem [shape: f32[1,32], index: 7, kind: input, shape index: {}]
  %s8 = inlined_call_operand.vmem [shape: f32[64,32], index: 8, kind: output, shape index: {}]
  %s9 = sld [smem:[#allocation0]]
  $region73: #{tpu_custom_call.1} parent=0
    _
  %s11 = ssub.s32 1, %s9
  %s12 = scalar_select 0, %s11, %s9
  $region1: #{tpu_custom_call.1} parent=0
    #allocation2 [shape = 'u8[8192]{0}', space=vmem, size = 0x2000, scoped, tag = 'input window, operand 0']
    #allocation3 [shape = 's32[2]{0}', space=sflag, size = 0x8, scoped, tag = 'scoped memory for tpu_custom_call.1']
    #allocation4 [shape = 'u8[32768]{0}', space=vmem, size = 0x8000, scoped, tag = 'input window, operand 4, single buffered']
    #allocation5 [shape = 's32[1]{0}', space=sflag, size = 0x4, scoped, tag = 'scoped memory for tpu_custom_call.1']
    %13 = vsyncpa [#allocation3], 0
    %s14 = scalar_lea.sflag [#allocation3], 1
    %15 = vsyncpa %s14, 0
    %16 = vsyncpa [#allocation5], 0
    loop: start=0, step=1, limit=6
    $region2: #{tpu_custom_call.1} parent=1 // loop_pre_header
      _
    $region3: #{tpu_custom_call.1} parent=1 // loop_header
      %s18 = sphi 0, %s22
      %p19 = scmp.ge.s32.totalorder %s18, 6
      %s28 = sphi 0, %s30
      %s31 = sphi 0, %s28
      %s32 = sphi 0, %s31
      %s48 = sphi 0, %s32
      %s52 = sphi 0, %s52
      %s54 = sphi 0, %s52
      %s55 = sphi 0, %s54
      %s69 = sphi 0, %s55
      %s73 = sphi 0, %s73
      %s75 = sphi 0, %s73
      %s76 = sphi 0, %s75
      %s90 = sphi 0, %s76
      %s94 = sphi 0, %s94
      %s96 = sphi 0, %s94
      %s97 = sphi 0, %s96
      %s111 = sphi 0, %s97
      %s115 = sphi 0, %s115
      %s117 = sphi 0, %s115
      %s118 = sphi 0, %s117
      %s132 = sphi 0, %s118
      %s136 = sphi 0, %s136
      %s138 = sphi 0, %s136
      %s139 = sphi 0, %s138
      %s153 = sphi 0, %s139
      %s157 = sphi 0, %s157
      %s159 = sphi 0, %s157
      %s160 = sphi 0, %s159
      %s174 = sphi 0, %s160
      %s178 = sphi 0, %s178
      %s180 = sphi 0, %s178
      %s181 = sphi 0, %s180
      %s195 = sphi 0, %s181
      %s201 = sphi 0, %s203
      %s204 = sphi 0, %s201
      %s205 = sphi 0, %s204
      %s221 = sphi 0, %s205
    $region4: #{tpu_custom_call.1} parent=1 // loop_header_branch
      %21 = sbr.rel (%p19) target = $region8
    $region5: #{tpu_custom_call.1} parent=1 // loop_body
      %s23 = ssub.s32 %s18, 1
      %s24 = ssub.s32 %s18, 2
      %s25 = sadd.s32 %s18, 1
      %s26 = ssub.s32 %s18, %s25
      %p27 = scmp.eq.s32.totalorder %s26, 0
      %s29 = sadd.s32 %s28, 1
      %s30 = scalar_select %p27, %s28, %s29
      %p33 = pneg %p27
      %p34 = scmp.eq.s32.totalorder %s18, 3
      %p35 = por %p33, %p34
      %p36 = scmp.ne.s32.totalorder %s28, %s31
      %p37 = scmp.eq.s32.totalorder %s18, 0
      %p38 = por %p36, %p37
      %p39 = scmp.ne.s32.totalorder %s28, %s31
      %p40 = scmp.eq.s32.totalorder %s23, 3
      %p41 = por %p39, %p40
      %p42 = scmp.ne.s32.totalorder %s31, %s32
      %p43 = scmp.eq.s32.totalorder %s23, 0
      %p44 = por %p42, %p43
      %p45 = scmp.ne.s32.totalorder %s31, %s32
      %p46 = scmp.eq.s32.totalorder %s24, 3
      %p47 = por %p45, %p46
      %p49 = scmp.ne.s32.totalorder %s32, %s48
      %p50 = scmp.eq.s32.totalorder %s24, 0
      %p51 = por %p49, %p50
      %s53 = sadd.s32 %s52, 1
      %p56 = scmp.eq.s32.totalorder %s18, 3
      %p57 = scmp.ne.s32.totalorder %s52, %s54
      %p58 = scmp.eq.s32.totalorder %s18, 0
      %p59 = por %p57, %p58
      %p60 = scmp.ne.s32.totalorder %s52, %s54
      %p61 = scmp.eq.s32.totalorder %s23, 3
      %p62 = por %p60, %p61
      %p63 = scmp.ne.s32.totalorder %s54, %s55
      %p64 = scmp.eq.s32.totalorder %s23, 0
      %p65 = por %p63, %p64
      %p66 = scmp.ne.s32.totalorder %s54, %s55
      %p67 = scmp.eq.s32.totalorder %s24, 3
      %p68 = por %p66, %p67
      %p70 = scmp.ne.s32.totalorder %s55, %s69
      %p71 = scmp.eq.s32.totalorder %s24, 0
      %p72 = por %p70, %p71
      %s74 = sadd.s32 %s73, 1
      %p77 = scmp.eq.s32.totalorder %s18, 3
      %p78 = scmp.ne.s32.totalorder %s73, %s75
      %p79 = scmp.eq.s32.totalorder %s18, 0
      %p80 = por %p78, %p79
      %p81 = scmp.ne.s32.totalorder %s73, %s75
      %p82 = scmp.eq.s32.totalorder %s23, 3
      %p83 = por %p81, %p82
      %p84 = scmp.ne.s32.totalorder %s75, %s76
      %p85 = scmp.eq.s32.totalorder %s23, 0
      %p86 = por %p84, %p85
      %p87 = scmp.ne.s32.totalorder %s75, %s76
      %p88 = scmp.eq.s32.totalorder %s24, 3
      %p89 = por %p87, %p88
      %p91 = scmp.ne.s32.totalorder %s76, %s90
      %p92 = scmp.eq.s32.totalorder %s24, 0
      %p93 = por %p91, %p92
      %s95 = sadd.s32 %s94, 1
      %p98 = scmp.eq.s32.totalorder %s18, 3
      %p99 = scmp.ne.s32.totalorder %s94, %s96
      %p100 = scmp.eq.s32.totalorder %s18, 0
      %p101 = por %p99, %p100
      %p102 = scmp.ne.s32.totalorder %s94, %s96
      %p103 = scmp.eq.s32.totalorder %s23, 3
      %p104 = por %p102, %p103
      %p105 = scmp.ne.s32.totalorder %s96, %s97
      %p106 = scmp.eq.s32.totalorder %s23, 0
      %p107 = por %p105, %p106
      %p108 = scmp.ne.s32.totalorder %s96, %s97
      %p109 = scmp.eq.s32.totalorder %s24, 3
      %p110 = por %p108, %p109
      %p112 = scmp.ne.s32.totalorder %s97, %s111
      %p113 = scmp.eq.s32.totalorder %s24, 0
      %p114 = por %p112, %p113
      %s116 = sadd.s32 %s115, 1
      %p119 = scmp.eq.s32.totalorder %s18, 3
      %p120 = scmp.ne.s32.totalorder %s115, %s117
      %p121 = scmp.eq.s32.totalorder %s18, 0
      %p122 = por %p120, %p121
      %p123 = scmp.ne.s32.totalorder %s115, %s117
      %p124 = scmp.eq.s32.totalorder %s23, 3
      %p125 = por %p123, %p124
      %p126 = scmp.ne.s32.totalorder %s117, %s118
      %p127 = scmp.eq.s32.totalorder %s23, 0
      %p128 = por %p126, %p127
      %p129 = scmp.ne.s32.totalorder %s117, %s118
      %p130 = scmp.eq.s32.totalorder %s24, 3
      %p131 = por %p129, %p130
      %p133 = scmp.ne.s32.totalorder %s118, %s132
      %p134 = scmp.eq.s32.totalorder %s24, 0
      %p135 = por %p133, %p134
      %s137 = sadd.s32 %s136, 1
      %p140 = scmp.eq.s32.totalorder %s18, 3
      %p141 = scmp.ne.s32.totalorder %s136, %s138
      %p142 = scmp.eq.s32.totalorder %s18, 0
      %p143 = por %p141, %p142
      %p144 = scmp.ne.s32.totalorder %s136, %s138
      %p145 = scmp.eq.s32.totalorder %s23, 3
      %p146 = por %p144, %p145
      %p147 = scmp.ne.s32.totalorder %s138, %s139
      %p148 = scmp.eq.s32.totalorder %s23, 0
      %p149 = por %p147, %p148
      %p150 = scmp.ne.s32.totalorder %s138, %s139
      %p151 = scmp.eq.s32.totalorder %s24, 3
      %p152 = por %p150, %p151
      %p154 = scmp.ne.s32.totalorder %s139, %s153
      %p155 = scmp.eq.s32.totalorder %s24, 0
      %p156 = por %p154, %p155
      %s158 = sadd.s32 %s157, 1
      %p161 = scmp.eq.s32.totalorder %s18, 3
      %p162 = scmp.ne.s32.totalorder %s157, %s159
      %p163 = scmp.eq.s32.totalorder %s18, 0
      %p164 = por %p162, %p163
      %p165 = scmp.ne.s32.totalorder %s157, %s159
      %p166 = scmp.eq.s32.totalorder %s23, 3
      %p167 = por %p165, %p166
      %p168 = scmp.ne.s32.totalorder %s159, %s160
      %p169 = scmp.eq.s32.totalorder %s23, 0
      %p170 = por %p168, %p169
      %p171 = scmp.ne.s32.totalorder %s159, %s160
      %p172 = scmp.eq.s32.totalorder %s24, 3
      %p173 = por %p171, %p172
      %p175 = scmp.ne.s32.totalorder %s160, %s174
      %p176 = scmp.eq.s32.totalorder %s24, 0
      %p177 = por %p175, %p176
      %s179 = sadd.s32 %s178, 1
      %p182 = scmp.eq.s32.totalorder %s18, 3
      %p183 = scmp.ne.s32.totalorder %s178, %s180
      %p184 = scmp.eq.s32.totalorder %s18, 0
      %p185 = por %p183, %p184
      %p186 = scmp.ne.s32.totalorder %s178, %s180
      %p187 = scmp.eq.s32.totalorder %s23, 3
      %p188 = por %p186, %p187
      %p189 = scmp.ne.s32.totalorder %s180, %s181
      %p190 = scmp.eq.s32.totalorder %s23, 0
      %p191 = por %p189, %p190
      %p192 = scmp.ne.s32.totalorder %s180, %s181
      %p193 = scmp.eq.s32.totalorder %s24, 3
      %p194 = por %p192, %p193
      %p196 = scmp.ne.s32.totalorder %s181, %s195
      %p197 = scmp.eq.s32.totalorder %s24, 0
      %p198 = por %p196, %p197
      %s199 = ssub.s32 %s18, %s25
      %p200 = scmp.eq.s32.totalorder %s199, 0
      %s202 = sadd.s32 %s201, 1
      %s203 = scalar_select %p200, %s201, %s202
      %p206 = pneg %p200
      %p207 = scmp.eq.s32.totalorder %s18, 3
      %p208 = por %p206, %p207
      %p209 = scmp.ne.s32.totalorder %s201, %s204
      %p210 = scmp.eq.s32.totalorder %s18, 0
      %p211 = por %p209, %p210
      %p212 = scmp.ne.s32.totalorder %s201, %s204
      %p213 = scmp.eq.s32.totalorder %s23, 3
      %p214 = por %p212, %p213
      %p215 = scmp.ne.s32.totalorder %s204, %s205
      %p216 = scmp.eq.s32.totalorder %s23, 0
      %p217 = por %p215, %p216
      %p218 = scmp.ne.s32.totalorder %s204, %s205
      %p219 = scmp.eq.s32.totalorder %s24, 3
      %p220 = por %p218, %p219
      %p222 = scmp.ne.s32.totalorder %s205, %s221
      %p223 = scmp.eq.s32.totalorder %s24, 0
      %p224 = por %p222, %p223
      %p225 = scmp.le.s32.totalorder 1, %s18
      %p226 = scmp.lt.s32.totalorder %s18, 5
      %p227 = pnand %p225, %p226
      %p228 = pneg %p227
      // Predicated region
      $region9: #{tpu_custom_call.1} parent=5 // pred_check
        _
      $region10: #{tpu_custom_call.1} parent=5 // pred_check_branch
        %230 = sbr.rel (%p227) target = $region12
      $region11: #{tpu_custom_call.1} parent=5 // pred_region
        %s231 = ssub.s32 %s18, 1
        // Predicated region
        $region13: #{tpu_custom_call.1} parent=11 // pred_check
          %p232 = pneg %p65
        $region14: #{tpu_custom_call.1} parent=11 // pred_check_branch
          %234 = sbr.rel (%p232) target = $region16
        $region15: #{tpu_custom_call.1} parent=11 // pred_region
          _
        $region16: #{tpu_custom_call.1} parent=11 // pred_fallthru
          _
        // Predicated region
        $region17: #{tpu_custom_call.1} parent=11 // pred_check
          %p235 = pneg %p86
        $region18: #{tpu_custom_call.1} parent=11 // pred_check_branch
          %237 = sbr.rel (%p235) target = $region20
        $region19: #{tpu_custom_call.1} parent=11 // pred_region
          _
        $region20: #{tpu_custom_call.1} parent=11 // pred_fallthru
          _
        // Predicated region
        $region21: #{tpu_custom_call.1} parent=11 // pred_check
          %p238 = pneg %p107
        $region22: #{tpu_custom_call.1} parent=11 // pred_check_branch
          %240 = sbr.rel (%p238) target = $region24
        $region23: #{tpu_custom_call.1} parent=11 // pred_region
          _
        $region24: #{tpu_custom_call.1} parent=11 // pred_fallthru
          _
        // Predicated region
        $region25: #{tpu_custom_call.1} parent=11 // pred_check
          %p241 = pneg %p128
        $region26: #{tpu_custom_call.1} parent=11 // pred_check_branch
          %243 = sbr.rel (%p241) target = $region28
        $region27: #{tpu_custom_call.1} parent=11 // pred_region
          %245 = vsyncadd [#allocation5], 0
          %s246 = sshll.u32 %s4, 4
          %s247 = int_to_ptr.hbm [resolvable:$true] %s246
          %s248 = sshll.u32 [#allocation4], 4
          %s249 = int_to_ptr.vmem [resolvable:$true] %s248
          %254 = dma.hbm_to_vmem [thread:$0]  %s247, 1024, %s249, [#allocation5], 64, 64, 4
        $region28: #{tpu_custom_call.1} parent=11 // pred_fallthru
          _
        // Predicated region
        $region29: #{tpu_custom_call.1} parent=11 // pred_check
          %p255 = pneg %p149
        $region30: #{tpu_custom_call.1} parent=11 // pred_check_branch
          %257 = sbr.rel (%p255) target = $region32
        $region31: #{tpu_custom_call.1} parent=11 // pred_region
          _
        $region32: #{tpu_custom_call.1} parent=11 // pred_fallthru
          _
        // Predicated region
        $region33: #{tpu_custom_call.1} parent=11 // pred_check
          %p258 = pneg %p170
        $region34: #{tpu_custom_call.1} parent=11 // pred_check_branch
          %260 = sbr.rel (%p258) target = $region36
        $region35: #{tpu_custom_call.1} parent=11 // pred_region
          _
        $region36: #{tpu_custom_call.1} parent=11 // pred_fallthru
          _
        // Predicated region
        $region37: #{tpu_custom_call.1} parent=11 // pred_check
          %p261 = pneg %p191
        $region38: #{tpu_custom_call.1} parent=11 // pred_check_branch
          %263 = sbr.rel (%p261) target = $region40
        $region39: #{tpu_custom_call.1} parent=11 // pred_region
          _
        $region40: #{tpu_custom_call.1} parent=11 // pred_fallthru
          _
      $region12: #{tpu_custom_call.1} parent=5 // pred_fallthru
        _
      %p264 = scmp.lt.s32.totalorder %s18, 4
      // Predicated region
      $region41: #{tpu_custom_call.1} parent=5 // pred_check
        %p265 = pneg %p264
      $region42: #{tpu_custom_call.1} parent=5 // pred_check_branch
        %267 = sbr.rel (%p265) target = $region44
      $region43: #{tpu_custom_call.1} parent=5 // pred_region
        // Predicated region
        $region45: #{tpu_custom_call.1} parent=43 // pred_check
          %p268 = pneg %p38
        $region46: #{tpu_custom_call.1} parent=43 // pred_check_branch
          %270 = sbr.rel (%p268) target = $region48
        $region47: #{tpu_custom_call.1} parent=43 // pred_region
          %s271 = sand.u32 %s28, 1
          %s272 = scalar_lea.sflag [#allocation3], %s271
          %s273 = sand.u32 %s28, 1
          %s274 = smul.addr %s273, 8
          %s275 = scalar_lea.vmem [#allocation2], %s274
          %s276 = smul.u32 2, %s18
          %278 = vsyncadd %s272, 0
          %s279 = smul.addr %s276, 4
          %s280 = scalar_lea.hbm %s0, %s279
          %s281 = sshll.u32 %s280, 4
          %s282 = int_to_ptr.hbm [resolvable:$true] %s281
          %s283 = sshll.u32 %s275, 4
          %s284 = int_to_ptr.vmem [resolvable:$true] %s283
          %289 = dma.hbm_to_vmem [thread:$0]  %s282, 128, %s284, %s272, 64, 64, 4
        $region48: #{tpu_custom_call.1} parent=43 // pred_fallthru
          _
      $region44: #{tpu_custom_call.1} parent=5 // pred_fallthru
        _
      %p290 = scmp.le.s32.totalorder 1, %s18
      %p291 = scmp.lt.s32.totalorder %s18, 5
      %p292 = pnand %p290, %p291
      %p293 = pneg %p292
      // Predicated region
      $region49: #{tpu_custom_call.1} parent=5 // pred_check
        _
      $region50: #{tpu_custom_call.1} parent=5 // pred_check_branch
        %295 = sbr.rel (%p292) target = $region52
      $region51: #{tpu_custom_call.1} parent=5 // pred_region
        %s296 = ssub.s32 %s18, 1
        %s297 = sand.u32 %s31, 1
        %s298 = scalar_lea.sflag [#allocation3], %s297
        %s299 = sand.u32 %s31, 1
        %s300 = smul.addr %s299, 8
        %s301 = scalar_lea.vmem [#allocation2], %s300
        // Predicated region
        $region53: #{tpu_custom_call.1} parent=51 // pred_check
          %p302 = pneg %p44
        $region54: #{tpu_custom_call.1} parent=51 // pred_check_branch
          %304 = sbr.rel (%p302) target = $region56
        $region55: #{tpu_custom_call.1} parent=51 // pred_region
          %306 = dma.done %s298, 128
        $region56: #{tpu_custom_call.1} parent=51 // pred_fallthru
          _
        // Predicated region
        $region57: #{tpu_custom_call.1} parent=51 // pred_check
          %p307 = pneg %p128
        $region58: #{tpu_custom_call.1} parent=51 // pred_check_branch
          %309 = sbr.rel (%p307) target = $region60
        $region59: #{tpu_custom_call.1} parent=51 // pred_region
          %311 = dma.done [#allocation5], 1024
        $region60: #{tpu_custom_call.1} parent=51 // pred_fallthru
          _
        %s312 = sand.u32 %s31, 1
        %s313 = scalar_lea.sflag [#allocation3], %s312
        %s314 = sand.u32 %s31, 1
        %s315 = smul.addr %s314, 8
        %s316 = scalar_lea.vmem [#allocation2], %s315
        %p317 = pneg %p44
        %p318 = pneg %p41
        %p319 = pneg %p65
        %p320 = pneg %p62
        %p321 = pneg %p86
        %p322 = pneg %p83
        %p323 = pneg %p107
        %p324 = pneg %p104
        %p325 = pneg %p128
        %p326 = pneg %p125
        %p327 = pneg %p149
        %p328 = pneg %p146
        %p329 = pneg %p170
        %p330 = pneg %p167
        %p331 = pneg %p191
        %p332 = pneg %p188
        %p333 = pneg %p217
        %p334 = pneg %p214
        %s335 = smul.u32 2, %s23
        %p336 = scmp.lt.s32.totalorder %s335, 7
        %s337 = scalar_select %p336, %s335, 7
        %s338 = smul.addr %s337, 8
        %s339 = scalar_lea.vmem %s8, %s338
        %s340 = smul.u32 2, %s23
        %s341 = smul.u32 2, %s23
        %p342 = scmp.lt.s32.totalorder %s341, 7
        %s343 = scalar_select %p342, %s341, 7
        %s344 = smul.addr %s343, 8
        %s345 = scalar_lea.vmem %s8, %s344
        %s346 = smul.u32 2, %s23
        %v347 = vld [vmem:[%s301] sm:$0xf]
        %v348 = vld [vmem:[%s301 + $0x4] sm:$0xf]
        %v349 = vld [vmem:[%s1] sm:$0xf]
        %v350 = vld [vmem:[%s1 + $0x4] sm:$0xf]
        %v351 = vld [vmem:[%s1 + $0x8] sm:$0xf]
        %v352 = vld [vmem:[%s1 + $0xc] sm:$0xf]
        %v353 = vld [vmem:[%s1 + $0x10] sm:$0xf]
        %v354 = vld [vmem:[%s1 + $0x14] sm:$0xf]
        %v355 = vld [vmem:[%s1 + $0x18] sm:$0xf]
        %v356 = vld [vmem:[%s1 + $0x1c] sm:$0xf]
        %v357 = vld [vmem:[%s1 + $0x20] sm:$0xf]
        %v358 = vld [vmem:[%s1 + $0x24] sm:$0xf]
        %v359 = vld [vmem:[%s1 + $0x28] sm:$0xf]
        %v360 = vld [vmem:[%s1 + $0x2c] sm:$0xf]
        %v361 = vld [vmem:[%s1 + $0x30] sm:$0xf]
        %v362 = vld [vmem:[%s1 + $0x34] sm:$0xf]
        %v363 = vld [vmem:[%s1 + $0x38] sm:$0xf]
        %v364 = vld [vmem:[%s1 + $0x3c] sm:$0xf]
        %v367 = vunpack.c.l.b16 %v347
        %v368 = vunpack.c.l.b16 %v348
        %v369 = vpack.c.b16 %v368, %v367
        %v387 = vunpack.c.l.b16 %v349
        %v388 = vunpack.c.l.b16 %v350
        %v389 = vunpack.c.l.b16 %v351
        %v390 = vunpack.c.l.b16 %v352
        %v391 = vunpack.c.l.b16 %v353
        %v392 = vunpack.c.l.b16 %v354
        %v393 = vunpack.c.l.b16 %v355
        %v394 = vunpack.c.l.b16 %v356
        %v395 = vunpack.c.l.b16 %v357
        %v396 = vunpack.c.l.b16 %v358
        %v397 = vunpack.c.l.b16 %v359
        %v398 = vunpack.c.l.b16 %v360
        %v399 = vunpack.c.l.b16 %v361
        %v400 = vunpack.c.l.b16 %v362
        %v401 = vunpack.c.l.b16 %v363
        %v402 = vunpack.c.l.b16 %v364
        %v403 = vpack.c.b16 %v388, %v387
        %v404 = vpack.c.b16 %v390, %v389
        %v405 = vpack.c.b16 %v392, %v391
        %v406 = vpack.c.b16 %v394, %v393
        %v407 = vpack.c.b16 %v396, %v395
        %v408 = vpack.c.b16 %v398, %v397
        %v409 = vpack.c.b16 %v400, %v399
        %v410 = vpack.c.b16 %v402, %v401
        %419 = vmatpush.bf16.msra.mxu0 %v410
        %420 = vmatpush.bf16.msra.mxu0 %v409
        %421 = vmatpush.bf16.msra.mxu0 %v408
        %422 = vmatpush.bf16.msra.mxu0 %v407
        %423 = vmatpush.bf16.msra.mxu0 %v406
        %424 = vmatpush.bf16.msra.mxu0 %v405
        %425 = vmatpush.bf16.msra.mxu0 %v404
        %426 = vmatpush.bf16.msra.mxu0 %v403
        %427 = vmatmul.bf16.gmra.mxu0 %v369
        %v428 = vpop.f32.mrf.mxu0
        %v429 = vadd.f32 0.0, %v428
        %v430 = vpop.f32.mrf.mxu0
        %v431 = vadd.f32 0.0, %v430
        %432 = vdwg.mxu0
        %v433 = vxor.u32 %v429, 2147483648
        %v434 = vxor.u32 %v431, 2147483648
        %v435 = vmul.f32 %v433, 1.442695
        %v436 = vpow.pop %v435
        %v437 = vmul.f32 %v434, 1.442695
        %v438 = vpow.pop %v437
        %v439 = vadd.f32 %v436, 1.0
        %v440 = vadd.f32 %v438, 1.0
        %v441 = vrcp.pop %v439
        %v442 = vmul.f32 %v439, %v441
        %v443 = vsub.f32 1.0, %v442
        %v444 = vmul.f32 %v441, %v443
        %v445 = vadd.f32 %v441, %v444
        %vm446 = vweird.f32 %v439
        %vm447 = vweird.f32 %v441
        %vm448 = vmor %vm446, %vm447
        %v449 = vsel %vm448, %v441, %v445
        %v450 = vand.u32 2147483647, %v439
        %vm451 = vcmp.eq.f32.partialorder %v450, 8.507059e+37
        %v452 = vand.u32 %v439, 2147483648
        %v453 = vor.u32 1.1754944e-38, %v452
        %v454 = vsel %vm451, %v453, %v449
        %v455 = vmul.f32 1.0, %v454
        %v456 = vrcp.pop %v440
        %v457 = vmul.f32 %v440, %v456
        %v458 = vsub.f32 1.0, %v457
        %v459 = vmul.f32 %v456, %v458
        %v460 = vadd.f32 %v456, %v459
        %vm461 = vweird.f32 %v440
        %vm462 = vweird.f32 %v456
        %vm463 = vmor %vm461, %vm462
        %v464 = vsel %vm463, %v456, %v460
        %v465 = vand.u32 2147483647, %v440
        %vm466 = vcmp.eq.f32.partialorder %v465, 8.507059e+37
        %v467 = vand.u32 %v440, 2147483648
        %v468 = vor.u32 1.1754944e-38, %v467
        %v469 = vsel %vm466, %v468, %v464
        %v470 = vmul.f32 1.0, %v469
        %v471 = vmul.f32 %v429, %v455
        %v472 = vmul.f32 %v431, %v470
        %473 = vadd.xlane.f32.xlu0 %v471
        %v474 = vpop.xlane.xlu0 %473
        %475 = vadd.xlane.f32.xlu0 %v472
        %v476 = vpop.xlane.xlu0 %475
        %v477 = vrcp.pop 128.0
        %v478 = vmul.f32 128.0, %v477
        %v479 = vsub.f32 1.0, %v478
        %v480 = vmul.f32 %v477, %v479
        %v481 = vadd.f32 %v477, %v480
        %vm482 = vweird.f32 %v477
        %v483 = vsel %vm482, %v477, %v481
        %v484 = vmul.f32 %v474, %v483
        %v485 = vmul.f32 %v476, %v483
        %v486 = vsub.f32 %v471, %v484
        %v487 = vsub.f32 %v472, %v485
        %v488 = vmul.f32 %v486, %v486
        %v489 = vmul.f32 %v487, %v487
        %490 = vadd.xlane.f32.xlu0 %v488
        %v491 = vpop.xlane.xlu0 %490
        %492 = vadd.xlane.f32.xlu0 %v489
        %v493 = vpop.xlane.xlu0 %492
        %v494 = vmul.f32 %v491, %v483
        %v495 = vmul.f32 %v493, %v483
        %v496 = vadd.f32 %v494, 1e-05
        %v497 = vadd.f32 %v495, 1e-05
        %v498 = vrsqrt.pop %v496
        %v499 = vmul.f32 %v498, %v496
        %v500 = vmul.f32 %v499, %v498
        %v501 = vmul.f32 0.5, %v500
        %v502 = vsub.f32 1.5, %v501
        %v503 = vmul.f32 %v498, %v502
        %vm504 = vweird.f32 %v496
        %vm505 = vweird.f32 %v498
        %vm506 = vmor %vm504, %vm505
        %v507 = vsel %vm506, %v498, %v503
        %v508 = vrsqrt.pop %v497
        %v509 = vmul.f32 %v508, %v497
        %v510 = vmul.f32 %v509, %v508
        %v511 = vmul.f32 0.5, %v510
        %v512 = vsub.f32 1.5, %v511
        %v513 = vmul.f32 %v508, %v512
        %vm514 = vweird.f32 %v497
        %vm515 = vweird.f32 %v508
        %vm516 = vmor %vm514, %vm515
        %v517 = vsel %vm516, %v508, %v513
        %v518 = vmul.f32 %v486, %v507
        %v519 = vmul.f32 %v487, %v517
        %v520 = vld [vmem:[%s2] sm:$0x1]
        %v522 = vperm.slane %v520, 0
        %v524 = vmul.f32 %v518, %v522
        %v525 = vmul.f32 %v519, %v522
        %v526 = vld [vmem:[%s3] sm:$0x1]
        %v528 = vperm.slane %v526, 0
        %v530 = vadd.f32 %v524, %v528
        %v531 = vadd.f32 %v525, %v528
        %v532 = vpack.c.bf16 %v531, %v530
        %v533 = vld [vmem:[#allocation4] sm:$0xf]
        %v534 = vld [vmem:[#allocation4 + $0x4] sm:$0xf]
        %v535 = vld [vmem:[#allocation4 + $0x8] sm:$0xf]
        %v536 = vld [vmem:[#allocation4 + $0xc] sm:$0xf]
        %v537 = vld [vmem:[#allocation4 + $0x10] sm:$0xf]
        %v538 = vld [vmem:[#allocation4 + $0x14] sm:$0xf]
        %v539 = vld [vmem:[#allocation4 + $0x18] sm:$0xf]
        %v540 = vld [vmem:[#allocation4 + $0x1c] sm:$0xf]
        %v541 = vld [vmem:[#allocation4 + $0x20] sm:$0xf]
        %v542 = vld [vmem:[#allocation4 + $0x24] sm:$0xf]
        %v543 = vld [vmem:[#allocation4 + $0x28] sm:$0xf]
        %v544 = vld [vmem:[#allocation4 + $0x2c] sm:$0xf]
        %v545 = vld [vmem:[#allocation4 + $0x30] sm:$0xf]
        %v546 = vld [vmem:[#allocation4 + $0x34] sm:$0xf]
        %v547 = vld [vmem:[#allocation4 + $0x38] sm:$0xf]
        %v548 = vld [vmem:[#allocation4 + $0x3c] sm:$0xf]
        %v549 = vld [vmem:[%s5] sm:$0x1]
        %v551 = vperm.slane %v549, 0
        %v569 = vunpack.c.l.b16 %v533
        %v570 = vunpack.c.l.b16 %v534
        %v571 = vunpack.c.l.b16 %v535
        %v572 = vunpack.c.l.b16 %v536
        %v573 = vunpack.c.l.b16 %v537
        %v574 = vunpack.c.l.b16 %v538
        %v575 = vunpack.c.l.b16 %v539
        %v576 = vunpack.c.l.b16 %v540
        %v577 = vunpack.c.l.b16 %v541
        %v578 = vunpack.c.l.b16 %v542
        %v579 = vunpack.c.l.b16 %v543
        %v580 = vunpack.c.l.b16 %v544
        %v581 = vunpack.c.l.b16 %v545
        %v582 = vunpack.c.l.b16 %v546
        %v583 = vunpack.c.l.b16 %v547
        %v584 = vunpack.c.l.b16 %v548
        %v585 = vpack.c.b16 %v570, %v569
        %v586 = vpack.c.b16 %v572, %v571
        %v587 = vpack.c.b16 %v574, %v573
        %v588 = vpack.c.b16 %v576, %v575
        %v589 = vpack.c.b16 %v578, %v577
        %v590 = vpack.c.b16 %v580, %v579
        %v591 = vpack.c.b16 %v582, %v581
        %v592 = vpack.c.b16 %v584, %v583
        %601 = vmatpush.bf16.msra.mxu0 %v592
        %602 = vmatpush.bf16.msra.mxu0 %v591
        %603 = vmatpush.bf16.msra.mxu0 %v590
        %604 = vmatpush.bf16.msra.mxu0 %v589
        %605 = vmatpush.bf16.msra.mxu0 %v588
        %606 = vmatpush.bf16.msra.mxu0 %v587
        %607 = vmatpush.bf16.msra.mxu0 %v586
        %608 = vmatpush.bf16.msra.mxu0 %v585
        %609 = vmatmul.bf16.gmra.mxu0 %v532
        %v610 = vpop.f32.mrf.mxu0
        %v611 = vadd.f32 %v551, %v610
        %v612 = vpop.f32.mrf.mxu0
        %v613 = vadd.f32 %v551, %v612
        %614 = vdwg.mxu0
        %v615 = vxor.u32 %v611, 2147483648
        %v616 = vxor.u32 %v613, 2147483648
        %v617 = vmul.f32 %v615, 1.442695
        %v618 = vpow.pop %v617
        %v619 = vmul.f32 %v616, 1.442695
        %v620 = vpow.pop %v619
        %v621 = vadd.f32 %v618, 1.0
        %v622 = vadd.f32 %v620, 1.0
        %v623 = vrcp.pop %v621
        %v624 = vmul.f32 %v621, %v623
        %v625 = vsub.f32 1.0, %v624
        %v626 = vmul.f32 %v623, %v625
        %v627 = vadd.f32 %v623, %v626
        %vm628 = vweird.f32 %v621
        %vm629 = vweird.f32 %v623
        %vm630 = vmor %vm628, %vm629
        %v631 = vsel %vm630, %v623, %v627
        %v632 = vand.u32 2147483647, %v621
        %vm633 = vcmp.eq.f32.partialorder %v632, 8.507059e+37
        %v634 = vand.u32 %v621, 2147483648
        %v635 = vor.u32 1.1754944e-38, %v634
        %v636 = vsel %vm633, %v635, %v631
        %v637 = vmul.f32 1.0, %v636
        %v638 = vrcp.pop %v622
        %v639 = vmul.f32 %v622, %v638
        %v640 = vsub.f32 1.0, %v639
        %v641 = vmul.f32 %v638, %v640
        %v642 = vadd.f32 %v638, %v641
        %vm643 = vweird.f32 %v622
        %vm644 = vweird.f32 %v638
        %vm645 = vmor %vm643, %vm644
        %v646 = vsel %vm645, %v638, %v642
        %v647 = vand.u32 2147483647, %v622
        %vm648 = vcmp.eq.f32.partialorder %v647, 8.507059e+37
        %v649 = vand.u32 %v622, 2147483648
        %v650 = vor.u32 1.1754944e-38, %v649
        %v651 = vsel %vm648, %v650, %v646
        %v652 = vmul.f32 1.0, %v651
        %v653 = vmul.f32 %v611, %v637
        %v654 = vmul.f32 %v613, %v652
        %v655 = vpack.c.bf16 %v654, %v653
        %v656 = vld [vmem:[%s6] sm:$0xf]
        %v657 = vld [vmem:[%s6 + $0x4] sm:$0xf]
        %v658 = vld [vmem:[%s6 + $0x8] sm:$0xf]
        %v659 = vld [vmem:[%s6 + $0xc] sm:$0xf]
        %v660 = vld [vmem:[%s6 + $0x10] sm:$0xf]
        %v661 = vld [vmem:[%s6 + $0x14] sm:$0xf]
        %v662 = vld [vmem:[%s6 + $0x18] sm:$0xf]
        %v663 = vld [vmem:[%s6 + $0x1c] sm:$0xf]
        %v664 = vld [vmem:[%s6 + $0x20] sm:$0xf]
        %v665 = vld [vmem:[%s6 + $0x24] sm:$0xf]
        %v666 = vld [vmem:[%s6 + $0x28] sm:$0xf]
        %v667 = vld [vmem:[%s6 + $0x2c] sm:$0xf]
        %v668 = vld [vmem:[%s6 + $0x30] sm:$0xf]
        %v669 = vld [vmem:[%s6 + $0x34] sm:$0xf]
        %v670 = vld [vmem:[%s6 + $0x38] sm:$0xf]
        %v671 = vld [vmem:[%s6 + $0x3c] sm:$0xf]
        %v672 = vld [vmem:[%s7] sm:$0x1]
        %v674 = vperm.slane %v672, 0
        %v692 = vunpack.c.l.b16 %v656
        %v693 = vunpack.c.l.b16 %v657
        %v694 = vunpack.c.l.b16 %v658
        %v695 = vunpack.c.l.b16 %v659
        %v696 = vunpack.c.l.b16 %v660
        %v697 = vunpack.c.l.b16 %v661
        %v698 = vunpack.c.l.b16 %v662
        %v699 = vunpack.c.l.b16 %v663
        %v700 = vunpack.c.l.b16 %v664
        %v701 = vunpack.c.l.b16 %v665
        %v702 = vunpack.c.l.b16 %v666
        %v703 = vunpack.c.l.b16 %v667
        %v704 = vunpack.c.l.b16 %v668
        %v705 = vunpack.c.l.b16 %v669
        %v706 = vunpack.c.l.b16 %v670
        %v707 = vunpack.c.l.b16 %v671
        %v708 = vpack.c.b16 %v693, %v692
        %v709 = vpack.c.b16 %v695, %v694
        %v710 = vpack.c.b16 %v697, %v696
        %v711 = vpack.c.b16 %v699, %v698
        %v712 = vpack.c.b16 %v701, %v700
        %v713 = vpack.c.b16 %v703, %v702
        %v714 = vpack.c.b16 %v705, %v704
        %v715 = vpack.c.b16 %v707, %v706
        %724 = vmatpush.bf16.msra.mxu0 %v715
        %725 = vmatpush.bf16.msra.mxu0 %v714
        %726 = vmatpush.bf16.msra.mxu0 %v713
        %727 = vmatpush.bf16.msra.mxu0 %v712
        %728 = vmatpush.bf16.msra.mxu0 %v711
        %729 = vmatpush.bf16.msra.mxu0 %v710
        %730 = vmatpush.bf16.msra.mxu0 %v709
        %731 = vmatpush.bf16.msra.mxu0 %v708
        %732 = vmatmul.bf16.gmra.mxu0 %v655
        %v733 = vpop.f32.mrf.mxu0
        %v734 = vadd.f32 %v674, %v733
        %v735 = vpop.f32.mrf.mxu0
        %v736 = vadd.f32 %v674, %v735
        %737 = vdwg.mxu0
        %vm738 = vcmask 261120
        %739 = vst.msk [vmem:[%s345] sm:$0xff] %vm738, %v734
        %740 = vst.msk [vmem:[%s345 + $0x8] sm:$0xff] %vm738, %v736
        %s741 = smul.u32 2, %s23
        %p742 = scmp.lt.s32.totalorder %s741, 7
        %s743 = scalar_select %p742, %s741, 7
        %s744 = smul.addr %s743, 8
        %s745 = scalar_lea.vmem %s8, %s744
        // Predicated region
        $region61: #{tpu_custom_call.1} parent=51 // pred_check
          %p746 = pneg %p214
        $region62: #{tpu_custom_call.1} parent=51 // pred_check_branch
          %748 = sbr.rel (%p746) target = $region64
        $region63: #{tpu_custom_call.1} parent=51 // pred_region
          %s749 = smul.u32 2, %s23
        $region64: #{tpu_custom_call.1} parent=51 // pred_fallthru
          _
      $region52: #{tpu_custom_call.1} parent=5 // pred_fallthru
        _
      %p750 = scmp.le.s32.totalorder 2, %s18
      // Predicated region
      $region65: #{tpu_custom_call.1} parent=5 // pred_check
        %p751 = pneg %p750
      $region66: #{tpu_custom_call.1} parent=5 // pred_check_branch
        %753 = sbr.rel (%p751) target = $region68
      $region67: #{tpu_custom_call.1} parent=5 // pred_region
        %s754 = ssub.s32 %s18, 2
        // Predicated region
        $region69: #{tpu_custom_call.1} parent=67 // pred_check
          %p755 = pneg %p220
        $region70: #{tpu_custom_call.1} parent=67 // pred_check_branch
          %757 = sbr.rel (%p755) target = $region72
        $region71: #{tpu_custom_call.1} parent=67 // pred_region
          %s758 = smul.u32 2, %s24
          %p759 = scmp.lt.s32.totalorder %s758, 7
          %s760 = scalar_select %p759, %s758, 7
          %s761 = smul.addr %s760, 8
          %s762 = scalar_lea.vmem %s8, %s761
        $region72: #{tpu_custom_call.1} parent=67 // pred_fallthru
          _
      $region68: #{tpu_custom_call.1} parent=5 // pred_fallthru
        _
    $region6: #{tpu_custom_call.1} parent=1 // loop_footer
      %s22 = sadd.s32 1, %s18
    $region7: #{tpu_custom_call.1} parent=1 // loop_footer_branch
      %17 = sbr.rel target = $region3
    $region8: #{tpu_custom_call.1} parent=1 // loop_exit
      _
    %763 = vsyncpa [#allocation3], 1
    %s764 = scalar_lea.sflag [#allocation3], 1
    %765 = vsyncpa %s764, 1
    %766 = vsyncpa [#allocation5], 1

</llo_original>
